<compile_context>
chip_gen: v7x
topology: tpu7x:2x2x1
jax: 0.10.0
libtpu: 0.0.40
codegen_flags: <defaults>
</compile_context>

<pallas_src>
import jax
import jax.numpy as jnp
from jax.experimental import pallas as pl
from jax.experimental.pallas import tpu as pltpu

_TARGET_CHUNKS = 4            # outstanding DMAs to keep the queue full
_SMALL_INPUT_BYTES = 64 * 1024


def net_forward(x: jax.Array) -> jax.Array:
    """Net.forward: empty nn.Sequential == exact identity.

    The optimal implementation is no kernel at all — just return the input.
    """
    return x


def _chunk_rows(dim0: int, target: int):
    """Split dim0 into <= `target` contiguous chunks with 8-row-aligned starts."""
    if dim0 < 8 * target:
        return [(0, dim0)]
    per = (dim0 // target) // 8 * 8
    chunks = []
    start = 0
    for _ in range(target - 1):
        chunks.append((start, per))
        start += per
    chunks.append((start, dim0 - start))
    return chunks


def _make_dma_copy_kernel(chunks, whole: bool):
    """Kernel: issue chunked HBM->HBM DMAs, then wait for all of them."""

    def kernel(x_ref, o_ref, sem):
        copies = []
        if whole:
            cp = pltpu.make_async_copy(x_ref, o_ref, sem.at[0])
            cp.start()
            copies.append(cp)
        else:
            for i, (start, size) in enumerate(chunks):
                cp = pltpu.make_async_copy(
                    x_ref.at[pl.ds(start, size)],
                    o_ref.at[pl.ds(start, size)],
                    sem.at[i],
                )
                cp.start()
                copies.append(cp)
        for cp in copies:
            cp.wait()

    return kernel


@jax.jit
def _pallas_copy(x: jax.Array) -> jax.Array:
    """Materialized identity: direct chunked HBM->HBM DMA copy of `x`."""
    if x.ndim >= 2:
        chunks = _chunk_rows(x.shape[0], _TARGET_CHUNKS)
    else:
        # 0-D / 1-D: a single whole-array DMA (no useful row axis to chunk).
        chunks = [(0, x.shape[0] if x.ndim == 1 else 1)]
    whole = len(chunks) == 1
    kernel = _make_dma_copy_kernel(chunks, whole)

    return pl.pallas_call(
        kernel,
        out_shape=jax.ShapeDtypeStruct(x.shape, x.dtype),
        in_specs=[pl.BlockSpec(memory_space=pl.ANY)],   # stay in HBM, no auto-DMA
        out_specs=pl.BlockSpec(memory_space=pl.ANY),    # write straight to HBM
        scratch_shapes=[pltpu.SemaphoreType.DMA((len(chunks),))],
    )(x)


def net_forward_pallas(x: jax.Array, *, small_input_bytes: int = _SMALL_INPUT_BYTES) -> jax.Array:
    """Identity forward; uses the Pallas DMA-copy kernel when a materialized
    copy is worth a kernel launch, otherwise returns `x` directly."""
    n_bytes = x.size * jnp.dtype(x.dtype).itemsize
    if n_bytes <= small_input_bytes:
        # Launch overhead would dominate by >100x for the module's real
        # (batch, 3) inputs — identity semantics let us skip the kernel.
        return x
    return _pallas_copy(x)


if __name__ == "__main__":
    key = jax.random.PRNGKey(0)
    k1, k2 = jax.random.split(key)

    # Small input consistent with the module: batch of points, input_size=3.
    x_small = jax.random.normal(k1, (8, 3), dtype=jnp.float32)

    # Optimal path (no kernel).
    y_fast = net_forward(x_small)
    assert y_fast.shape == x_small.shape and y_fast.dtype == x_small.dtype
    assert bool(jnp.all(y_fast == x_small))

    # Force the Pallas DMA-copy kernel at the tiny/ragged shape to validate it.
    y_small = jax.block_until_ready(net_forward_pallas(x_small, small_input_bytes=0))
    assert y_small.shape == x_small.shape and y_small.dtype == x_small.dtype
    assert bool(jnp.all(y_small == x_small))

    # Larger (still small, ~384 KiB) input: exceeds the small-input threshold
    # and exercises the multi-chunk (4 outstanding DMAs) path.
    x_big = jax.random.normal(k2, (32768, 3), dtype=jnp.float32)
    y_big = jax.block_until_ready(net_forward_pallas(x_big))
    assert y_big.shape == x_big.shape and y_big.dtype == x_big.dtype
    assert bool(jnp.all(y_big == x_big))

    print("KERNEL_OK")
</pallas_src>

<mosaic_0001>
module attributes {stable_mosaic.version = 11 : i64} {
  func.func @kernel(%arg0: memref<8x3xf32, #tpu.memory_space<any>>, %arg1: memref<8x3xf32, #tpu.memory_space<any>>, %arg2: memref<1x!tpu.dma_semaphore, #tpu.memory_space<semaphore_mem>>) attributes {dimension_semantics = [], scalar_prefetch = 0 : i64, scratch_operands = 1 : i64, tpu.core_type = #tpu.core_type<tc>} {
    %c0_i32 = arith.constant 0 : i32
    %0 = tpu.memref_slice %arg2[%c0_i32] : memref<1x!tpu.dma_semaphore, #tpu.memory_space<semaphore_mem>> -> memref<1x!tpu.dma_semaphore, #tpu.memory_space<semaphore_mem>>
    %1 = tpu.memref_squeeze %0 : memref<1x!tpu.dma_semaphore, #tpu.memory_space<semaphore_mem>> -> memref<!tpu.dma_semaphore, #tpu.memory_space<semaphore_mem>>
    tpu.enqueue_dma source(%arg0 : memref<8x3xf32, #tpu.memory_space<any>>) target(%arg1 : memref<8x3xf32, #tpu.memory_space<any>>) target_semaphore(%1 : memref<!tpu.dma_semaphore, #tpu.memory_space<semaphore_mem>>)
    %c0_i32_0 = arith.constant 0 : i32
    %2 = tpu.memref_slice %arg2[%c0_i32_0] : memref<1x!tpu.dma_semaphore, #tpu.memory_space<semaphore_mem>> -> memref<1x!tpu.dma_semaphore, #tpu.memory_space<semaphore_mem>>
    %3 = tpu.memref_squeeze %2 : memref<1x!tpu.dma_semaphore, #tpu.memory_space<semaphore_mem>> -> memref<!tpu.dma_semaphore, #tpu.memory_space<semaphore_mem>>
    tpu.wait_dma2 semaphore(%3 : memref<!tpu.dma_semaphore, #tpu.memory_space<semaphore_mem>>) src(%arg0 : memref<8x3xf32, #tpu.memory_space<any>>) dst(%arg1 : memref<8x3xf32, #tpu.memory_space<any>>)
    return
  }
}

</mosaic_0001>

<llo_original>
// kernel: _pallas_copy.1
$region0: #{_pallas_copy.1}
  #allocation0 [shape = 'u32[]', space=smem, size = 0x4, offset = 0x4, fixed_abs, tag = 'smem constant byte address 0x4 - core index']
  #allocation1 [shape = 'u32[144,128]{1,0:T(1,128)}', space=vmem, size = 0x12000, scoped, tag = 'internal scratch']
  #allocation2 [shape = 's32[1]{0}', space=sflag, size = 0x4, scoped, tag = 'scratch operand']
  #allocation3 [shape = 's32[]', space=sflag, size = 0x4, offset = 0, fixed_abs, tag = 'sflag constant byte address 0x0 - dummy sync flag']
  %s0 = inlined_call_operand.vmem [shape: f32[8,3], index: 0, kind: input, shape index: {}]
  %s1 = inlined_call_operand.vmem [shape: f32[8,3], index: 1, kind: output, shape index: {}]
  %s2 = sld [smem:[#allocation0]]
  $region36: #{_pallas_copy.1} parent=0
    _
  %s4 = ssub.s32 1, %s2
  %s5 = scalar_select 0, %s4, %s2
  %p7 = scmp.lt.u32.totalorder 8, 8
  %p8 = pneg %p7
  // Predicated region
  $region2: #{_pallas_copy.1} parent=0 // pred_check
    _
  $region3: #{_pallas_copy.1} parent=0 // pred_check_branch
    %10 = sbr.rel (%p7) target = $region5
  $region4: #{_pallas_copy.1} parent=0 // pred_region
    %s25 = sand.u32 8, 7
    %p26 = scmp.eq.s32.totalorder %s25, 0
    // Predicated region
    $region17: #{_pallas_copy.1} parent=4 // pred_check
      %p27 = pneg %p26
    $region18: #{_pallas_copy.1} parent=4 // pred_check_branch
      %29 = sbr.rel (%p27) target = $region20
    $region19: #{_pallas_copy.1} parent=4 // pred_region
      loop: start=0, step=1, limit=1
      $region21: #{_pallas_copy.1} parent=19 // loop_pre_header
        _
      $region22: #{_pallas_copy.1} parent=19 // loop_header
        %s31 = sphi 0, %s35
        %p32 = scmp.ge.s32.totalorder %s31, 1
        %s36 = sphi %s0, %s0
        %s37 = sphi %s1, %s1
      $region23: #{_pallas_copy.1} parent=19 // loop_header_branch
        %34 = sbr.rel (%p32) target = $region27
      $region24: #{_pallas_copy.1} parent=19 // loop_body
        %v38 = vld [vmem:[%s36] sm:$0xff]
        %39 = vst [vmem:[%s37] sm:$0xff] %v38
      $region25: #{_pallas_copy.1} parent=19 // loop_footer
        %s35 = sadd.s32 1, %s31
      $region26: #{_pallas_copy.1} parent=19 // loop_footer_branch
        %30 = sbr.rel target = $region22
      $region27: #{_pallas_copy.1} parent=19 // loop_exit
        _
    $region20: #{_pallas_copy.1} parent=4 // pred_fallthru
      _
    %p40 = pneg %p26
    // Predicated region
    $region28: #{_pallas_copy.1} parent=4 // pred_check
      _
    $region29: #{_pallas_copy.1} parent=4 // pred_check_branch
      %42 = sbr.rel (%p26) target = $region31
    $region30: #{_pallas_copy.1} parent=4 // pred_region
      %s43 = sand.u32 8, 7
    $region31: #{_pallas_copy.1} parent=4 // pred_fallthru
      _
  $region5: #{_pallas_copy.1} parent=0 // pred_fallthru
    _
  // Predicated region
  $region6: #{_pallas_copy.1} parent=0 // pred_check
    %p11 = pneg %p7
  $region7: #{_pallas_copy.1} parent=0 // pred_check_branch
    %13 = sbr.rel (%p11) target = $region9
  $region8: #{_pallas_copy.1} parent=0 // pred_region
    %s14 = sshllo.u32 0, 8
    loop: start=0, step=1, limit=1
    $region10: #{_pallas_copy.1} parent=8 // loop_pre_header
      _
    $region11: #{_pallas_copy.1} parent=8 // loop_header
      %s16 = sphi 0, %s20
      %p17 = scmp.ge.s32.totalorder %s16, 1
      %s21 = sphi %s0, %s0
      %s22 = sphi %s1, %s1
    $region12: #{_pallas_copy.1} parent=8 // loop_header_branch
      %19 = sbr.rel (%p17) target = $region16
    $region13: #{_pallas_copy.1} parent=8 // loop_body
      %v23 = vld [vmem:[%s21] sm:%s14]
      %24 = vst [vmem:[%s22] sm:%s14] %v23
    $region14: #{_pallas_copy.1} parent=8 // loop_footer
      %s20 = sadd.s32 1, %s16
    $region15: #{_pallas_copy.1} parent=8 // loop_footer_branch
      %15 = sbr.rel target = $region11
    $region16: #{_pallas_copy.1} parent=8 // loop_exit
      _
  $region9: #{_pallas_copy.1} parent=0 // pred_fallthru
    _
  // Predicated region
  $region32: #{_pallas_copy.1} parent=0 // pred_check
    _
  $region33: #{_pallas_copy.1} parent=0 // pred_check_branch
    %46 = sbr.rel (0) target = $region35
  $region34: #{_pallas_copy.1} parent=0 // pred_region
    %47 = vsyncadd [#allocation2], 128
  $region35: #{_pallas_copy.1} parent=0 // pred_fallthru
    _
  %s48 = smul.u32 8, 1
  %s49 = sshll.u32 %s48, 4
  %50 = dma.done [#allocation2], %s49
  %51 = vsyncmov [#allocation2]
  %s52 = vpop.sfrf %51
  %p53 = scmp.eq.s32.totalorder %s52, 0
  %p54 = pneg %p53
  %56 = shalt.err (%p54)

</llo_original>
